<compile_context>
chip_gen: v7x
topology: tpu7x:2x2x1
jax: 0.10.0
libtpu: 0.0.40
codegen_flags: <defaults>
</compile_context>

<pallas_src>
import jax
import jax.numpy as jnp
from jax.experimental import pallas as pl
from jax.experimental.pallas import tpu as pltpu


def lstm_net_kernel(x_ref, wih_ref, whh_ref, b_ref, wemb_ref, bemb_ref, out_ref):
    """Whole forward pass in a single kernel invocation (no grid).

    x_ref    : (B, T, D)   f32   batch-major, as supplied by the caller
    wih_ref  : (D, 4H)     bf16  W_ih^T
    whh_ref  : (H, 4H)     bf16  W_hh^T
    b_ref    : (1, 4H)     f32   b_ih + b_hh
    wemb_ref : (H, E)      bf16  W_emb^T
    bemb_ref : (1, E)      f32
    out_ref  : (B, E)      f32
    """
    B, T, D = x_ref.shape
    H4 = whh_ref.shape[1]
    H = H4 // 4

    # ---- Phase 1: hoisted input projection, one MXU matmul, bias folded ----
    x_all = x_ref[...].reshape(B * T, D).astype(wih_ref.dtype)      # bf16 rows b*T + t
    xg = jnp.dot(x_all, wih_ref[...],
                 preferred_element_type=jnp.float32)                 # (B*T, 4H) f32
    xg = (xg + b_ref[...]).reshape(B, T, H4)                         # value; stays in vregs

    whh = whh_ref[...]                                               # (H, 4H) bf16, resident

    # ---- Phase 2: serial recurrence (only h @ W_hh on the critical path) ---
    # Trace-time-unrolled Python loop: t is static, so xg[:, t, :] is a static
    # slice (no dynamic-slice, no VMEM round trip).  T is small here.
    h = jnp.zeros((B, H), jnp.float32)
    c = jnp.zeros((B, H), jnp.float32)
    s = jnp.zeros((B, H), jnp.float32)
    for t in range(T):
        g = xg[:, t, :] + jnp.dot(h.astype(whh.dtype), whh,
                                  preferred_element_type=jnp.float32)  # (B, 4H) f32
        # Full-width nonlinearities: 2 EUP pushes instead of 4 partial ones.
        sig = jax.nn.sigmoid(g)
        tnh = jnp.tanh(g)
        i_g = sig[:, 0 * H:1 * H]
        f_g = sig[:, 1 * H:2 * H]
        g_g = tnh[:, 2 * H:3 * H]
        o_g = sig[:, 3 * H:4 * H]
        c = f_g * c + i_g * g_g
        h = o_g * jnp.tanh(c)
        s = s + h

    # ---- Phase 3: mean-pool over time + embedding Linear --------------------
    pooled = s * (1.0 / T)
    emb = jnp.dot(pooled.astype(wemb_ref.dtype), wemb_ref[...],
                  preferred_element_type=jnp.float32) + bemb_ref[...]
    out_ref[...] = emb.astype(out_ref.dtype)


@jax.jit
def lstm_net_forward(x, params):
    """x: (B, T, input_dim) float32 (PyTorch batch_first convention).

    The wrapper issues no standalone transpose / pad / cast / slice ops —
    just the pallas_call (weight casts happen once, in init_params).
    """
    B, T, _ = x.shape
    E = params["w_emb"].shape[1]
    return pl.pallas_call(
        lstm_net_kernel,
        out_shape=jax.ShapeDtypeStruct((B, E), jnp.float32),
        in_specs=[pl.BlockSpec(memory_space=pltpu.MemorySpace.VMEM)] * 6,
        out_specs=pl.BlockSpec(memory_space=pltpu.MemorySpace.VMEM),
    )(x, params["w_ih"], params["w_hh"], params["bias"],
      params["w_emb"], params["b_emb"])


def init_params(key, input_dim, hidden_dim, embedding_dim):
    """Deterministic init mirroring PyTorch's U(-1/sqrt(H), 1/sqrt(H)) for LSTM
    and U(-1/sqrt(fan_in), 1/sqrt(fan_in)) for Linear.  Weights are stored
    pre-transposed and pre-cast to bf16 (one-time cost) so the per-call
    wrapper has nothing to do."""
    k = jax.random.split(key, 6)
    s_lstm = 1.0 / jnp.sqrt(hidden_dim)
    s_lin = 1.0 / jnp.sqrt(hidden_dim)
    w_ih = jax.random.uniform(k[0], (4 * hidden_dim, input_dim),
                              minval=-s_lstm, maxval=s_lstm, dtype=jnp.float32)
    w_hh = jax.random.uniform(k[1], (4 * hidden_dim, hidden_dim),
                              minval=-s_lstm, maxval=s_lstm, dtype=jnp.float32)
    b_ih = jax.random.uniform(k[2], (4 * hidden_dim,),
                              minval=-s_lstm, maxval=s_lstm, dtype=jnp.float32)
    b_hh = jax.random.uniform(k[3], (4 * hidden_dim,),
                              minval=-s_lstm, maxval=s_lstm, dtype=jnp.float32)
    w_emb = jax.random.uniform(k[4], (embedding_dim, hidden_dim),
                               minval=-s_lin, maxval=s_lin, dtype=jnp.float32)
    b_emb = jax.random.uniform(k[5], (embedding_dim,),
                               minval=-s_lin, maxval=s_lin, dtype=jnp.float32)
    return {
        "w_ih": w_ih.T.astype(jnp.bfloat16),      # (input_dim, 4H)
        "w_hh": w_hh.T.astype(jnp.bfloat16),      # (H, 4H)
        "bias": (b_ih + b_hh)[None, :],           # (1, 4H) f32
        "w_emb": w_emb.T.astype(jnp.bfloat16),    # (H, E)
        "b_emb": b_emb[None, :],                  # (1, E) f32
    }


def lstm_net_ref(x, params, mxu_dtype=jnp.bfloat16):
    """Pure-JAX reference mirroring the kernel's arithmetic:
    matmul operands cast to `mxu_dtype`, f32 accumulation, f32 elementwise."""
    B, T, D_in = x.shape
    H = params["w_hh"].shape[0]
    w_ih = params["w_ih"].astype(mxu_dtype)
    w_hh = params["w_hh"].astype(mxu_dtype)
    w_emb = params["w_emb"].astype(mxu_dtype)

    xg = jnp.dot(x.astype(mxu_dtype).reshape(B * T, D_in), w_ih,
                 preferred_element_type=jnp.float32).reshape(B, T, 4 * H)
    xg = jnp.transpose(xg, (1, 0, 2)) + params["bias"].astype(jnp.float32)  # (T, B, 4H)

    def step(carry, g_x):
        h, c = carry
        g = g_x + jnp.dot(h.astype(mxu_dtype), w_hh,
                          preferred_element_type=jnp.float32)
        i = jax.nn.sigmoid(g[:, 0 * H:1 * H])
        f = jax.nn.sigmoid(g[:, 1 * H:2 * H])
        gg = jnp.tanh(g[:, 2 * H:3 * H])
        o = jax.nn.sigmoid(g[:, 3 * H:4 * H])
        c = f * c + i * gg
        h = o * jnp.tanh(c)
        return (h, c), h

    h0 = jnp.zeros((B, H), jnp.float32)
    c0 = jnp.zeros((B, H), jnp.float32)
    (_, _), hs = jax.lax.scan(step, (h0, c0), xg)
    pooled = hs.mean(axis=0)
    return (jnp.dot(pooled.astype(mxu_dtype), w_emb,
                    preferred_element_type=jnp.float32)
            + params["b_emb"].astype(jnp.float32))


if __name__ == "__main__":
    key = jax.random.PRNGKey(0)
    k_x, k_p = jax.random.split(key)

    B, T = 2, 8
    input_dim, hidden_dim, embedding_dim = 16, 32, 16

    x = jax.random.normal(k_x, (B, T, input_dim), dtype=jnp.float32)
    params = init_params(k_p, input_dim, hidden_dim, embedding_dim)

    out = jax.block_until_ready(lstm_net_forward(x, params))
    assert out.shape == (B, embedding_dim)

    ref_bf16 = lstm_net_ref(x, params, mxu_dtype=jnp.bfloat16)   # matched arithmetic
    ref_f32 = lstm_net_ref(x, params, mxu_dtype=jnp.float32)     # full-precision sanity
    assert jnp.allclose(out, ref_bf16, atol=2e-3, rtol=2e-3), \
        "mismatch vs matched (bf16-MXU) reference"
    assert jnp.allclose(out, ref_f32, atol=5e-2, rtol=5e-2), \
        "mismatch vs f32 reference"

    print("KERNEL_OK")
</pallas_src>

<mosaic_0001>
module attributes {stable_mosaic.version = 11 : i64} {
  func.func @lstm_net_kernel(%arg0: memref<2x8x16xf32, #tpu.memory_space<vmem>>, %arg1: memref<16x128xbf16, #tpu.memory_space<vmem>>, %arg2: memref<32x128xbf16, #tpu.memory_space<vmem>>, %arg3: memref<1x128xf32, #tpu.memory_space<vmem>>, %arg4: memref<32x16xbf16, #tpu.memory_space<vmem>>, %arg5: memref<1x16xf32, #tpu.memory_space<vmem>>, %arg6: memref<2x16xf32, #tpu.memory_space<vmem>>) attributes {dimension_semantics = [], scalar_prefetch = 0 : i64, scratch_operands = 0 : i64, tpu.core_type = #tpu.core_type<tc>} {
    %c0 = arith.constant 0 : index
    %c0_0 = arith.constant 0 : index
    %c0_1 = arith.constant 0 : index
    %0 = vector.load %arg0[%c0, %c0_0, %c0_1] : memref<2x8x16xf32, #tpu.memory_space<vmem>>, vector<2x8x16xf32>
    %1 = vector.shape_cast %0 : vector<2x8x16xf32> to vector<16x16xf32>
    %2 = arith.truncf %1 : vector<16x16xf32> to vector<16x16xbf16>
    %c0_2 = arith.constant 0 : index
    %c0_3 = arith.constant 0 : index
    %3 = vector.load %arg1[%c0_2, %c0_3] : memref<16x128xbf16, #tpu.memory_space<vmem>>, vector<16x128xbf16>
    %cst = arith.constant dense<0.000000e+00> : vector<16x128xf32>
    %4 = tpu.matmul %2, %3, %cst {dimension_numbers = #tpu.dot_dimension_numbers<[1], [0], [0], [1], [0, 0, 1, 1], [], []>} : vector<16x16xbf16>, vector<16x128xbf16>, vector<16x128xf32> -> vector<16x128xf32>
    %c0_4 = arith.constant 0 : index
    %c0_5 = arith.constant 0 : index
    %5 = vector.load %arg3[%c0_4, %c0_5] : memref<1x128xf32, #tpu.memory_space<vmem>>, vector<1x128xf32>
    %6 = vector.broadcast %5 : vector<1x128xf32> to vector<16x128xf32>
    %7 = arith.addf %4, %6 : vector<16x128xf32>
    %8 = vector.shape_cast %7 : vector<16x128xf32> to vector<2x8x128xf32>
    %c0_6 = arith.constant 0 : index
    %c0_7 = arith.constant 0 : index
    %9 = vector.load %arg2[%c0_6, %c0_7] : memref<32x128xbf16, #tpu.memory_space<vmem>>, vector<32x128xbf16>
    %cst_8 = arith.constant 0.000000e+00 : f32
    %10 = vector.broadcast %cst_8 : f32 to vector<2x32xf32>
    %cst_9 = arith.constant 0.000000e+00 : f32
    %11 = vector.broadcast %cst_9 : f32 to vector<2x32xf32>
    %cst_10 = arith.constant 0.000000e+00 : f32
    %12 = vector.broadcast %cst_10 : f32 to vector<2x32xf32>
    %13 = vector.extract_strided_slice %8 {offsets = [0, 0, 0], sizes = [2, 1, 128], strides = [1, 1, 1]} : vector<2x8x128xf32> to vector<2x1x128xf32>
    %14 = vector.shape_cast %13 : vector<2x1x128xf32> to vector<2x128xf32>
    %15 = arith.truncf %10 : vector<2x32xf32> to vector<2x32xbf16>
    %cst_11 = arith.constant dense<0.000000e+00> : vector<2x128xf32>
    %16 = tpu.matmul %15, %9, %cst_11 {dimension_numbers = #tpu.dot_dimension_numbers<[1], [0], [0], [1], [0, 0, 1, 1], [], []>} : vector<2x32xbf16>, vector<32x128xbf16>, vector<2x128xf32> -> vector<2x128xf32>
    %17 = arith.addf %14, %16 : vector<2x128xf32>
    %18 = arith.negf %17 : vector<2x128xf32>
    %19 = math.exp %18 : vector<2x128xf32>
    %cst_12 = arith.constant 1.000000e+00 : f32
    %20 = vector.broadcast %cst_12 : f32 to vector<2x128xf32>
    %21 = arith.addf %20, %19 : vector<2x128xf32>
    %22 = arith.divf %20, %21 : vector<2x128xf32>
    %23 = math.tanh %17 : vector<2x128xf32>
    %24 = vector.extract_strided_slice %22 {offsets = [0, 0], sizes = [2, 32], strides = [1, 1]} : vector<2x128xf32> to vector<2x32xf32>
    %25 = vector.extract_strided_slice %22 {offsets = [0, 32], sizes = [2, 32], strides = [1, 1]} : vector<2x128xf32> to vector<2x32xf32>
    %26 = vector.extract_strided_slice %23 {offsets = [0, 64], sizes = [2, 32], strides = [1, 1]} : vector<2x128xf32> to vector<2x32xf32>
    %27 = vector.extract_strided_slice %22 {offsets = [0, 96], sizes = [2, 32], strides = [1, 1]} : vector<2x128xf32> to vector<2x32xf32>
    %28 = arith.mulf %25, %11 : vector<2x32xf32>
    %29 = arith.mulf %24, %26 : vector<2x32xf32>
    %30 = arith.addf %28, %29 : vector<2x32xf32>
    %31 = math.tanh %30 : vector<2x32xf32>
    %32 = arith.mulf %27, %31 : vector<2x32xf32>
    %33 = arith.addf %12, %32 : vector<2x32xf32>
    %34 = vector.extract_strided_slice %8 {offsets = [0, 1, 0], sizes = [2, 1, 128], strides = [1, 1, 1]} : vector<2x8x128xf32> to vector<2x1x128xf32>
    %35 = vector.shape_cast %34 : vector<2x1x128xf32> to vector<2x128xf32>
    %36 = arith.truncf %32 : vector<2x32xf32> to vector<2x32xbf16>
    %cst_13 = arith.constant dense<0.000000e+00> : vector<2x128xf32>
    %37 = tpu.matmul %36, %9, %cst_13 {dimension_numbers = #tpu.dot_dimension_numbers<[1], [0], [0], [1], [0, 0, 1, 1], [], []>} : vector<2x32xbf16>, vector<32x128xbf16>, vector<2x128xf32> -> vector<2x128xf32>
    %38 = arith.addf %35, %37 : vector<2x128xf32>
    %39 = arith.negf %38 : vector<2x128xf32>
    %40 = math.exp %39 : vector<2x128xf32>
    %cst_14 = arith.constant 1.000000e+00 : f32
    %41 = vector.broadcast %cst_14 : f32 to vector<2x128xf32>
    %42 = arith.addf %41, %40 : vector<2x128xf32>
    %43 = arith.divf %41, %42 : vector<2x128xf32>
    %44 = math.tanh %38 : vector<2x128xf32>
    %45 = vector.extract_strided_slice %43 {offsets = [0, 0], sizes = [2, 32], strides = [1, 1]} : vector<2x128xf32> to vector<2x32xf32>
    %46 = vector.extract_strided_slice %43 {offsets = [0, 32], sizes = [2, 32], strides = [1, 1]} : vector<2x128xf32> to vector<2x32xf32>
    %47 = vector.extract_strided_slice %44 {offsets = [0, 64], sizes = [2, 32], strides = [1, 1]} : vector<2x128xf32> to vector<2x32xf32>
    %48 = vector.extract_strided_slice %43 {offsets = [0, 96], sizes = [2, 32], strides = [1, 1]} : vector<2x128xf32> to vector<2x32xf32>
    %49 = arith.mulf %46, %30 : vector<2x32xf32>
    %50 = arith.mulf %45, %47 : vector<2x32xf32>
    %51 = arith.addf %49, %50 : vector<2x32xf32>
    %52 = math.tanh %51 : vector<2x32xf32>
    %53 = arith.mulf %48, %52 : vector<2x32xf32>
    %54 = arith.addf %33, %53 : vector<2x32xf32>
    %55 = vector.extract_strided_slice %8 {offsets = [0, 2, 0], sizes = [2, 1, 128], strides = [1, 1, 1]} : vector<2x8x128xf32> to vector<2x1x128xf32>
    %56 = vector.shape_cast %55 : vector<2x1x128xf32> to vector<2x128xf32>
    %57 = arith.truncf %53 : vector<2x32xf32> to vector<2x32xbf16>
    %cst_15 = arith.constant dense<0.000000e+00> : vector<2x128xf32>
    %58 = tpu.matmul %57, %9, %cst_15 {dimension_numbers = #tpu.dot_dimension_numbers<[1], [0], [0], [1], [0, 0, 1, 1], [], []>} : vector<2x32xbf16>, vector<32x128xbf16>, vector<2x128xf32> -> vector<2x128xf32>
    %59 = arith.addf %56, %58 : vector<2x128xf32>
    %60 = arith.negf %59 : vector<2x128xf32>
    %61 = math.exp %60 : vector<2x128xf32>
    %cst_16 = arith.constant 1.000000e+00 : f32
    %62 = vector.broadcast %cst_16 : f32 to vector<2x128xf32>
    %63 = arith.addf %62, %61 : vector<2x128xf32>
    %64 = arith.divf %62, %63 : vector<2x128xf32>
    %65 = math.tanh %59 : vector<2x128xf32>
    %66 = vector.extract_strided_slice %64 {offsets = [0, 0], sizes = [2, 32], strides = [1, 1]} : vector<2x128xf32> to vector<2x32xf32>
    %67 = vector.extract_strided_slice %64 {offsets = [0, 32], sizes = [2, 32], strides = [1, 1]} : vector<2x128xf32> to vector<2x32xf32>
    %68 = vector.extract_strided_slice %65 {offsets = [0, 64], sizes = [2, 32], strides = [1, 1]} : vector<2x128xf32> to vector<2x32xf32>
    %69 = vector.extract_strided_slice %64 {offsets = [0, 96], sizes = [2, 32], strides = [1, 1]} : vector<2x128xf32> to vector<2x32xf32>
    %70 = arith.mulf %67, %51 : vector<2x32xf32>
    %71 = arith.mulf %66, %68 : vector<2x32xf32>
    %72 = arith.addf %70, %71 : vector<2x32xf32>
    %73 = math.tanh %72 : vector<2x32xf32>
    %74 = arith.mulf %69, %73 : vector<2x32xf32>
    %75 = arith.addf %54, %74 : vector<2x32xf32>
    %76 = vector.extract_strided_slice %8 {offsets = [0, 3, 0], sizes = [2, 1, 128], strides = [1, 1, 1]} : vector<2x8x128xf32> to vector<2x1x128xf32>
    %77 = vector.shape_cast %76 : vector<2x1x128xf32> to vector<2x128xf32>
    %78 = arith.truncf %74 : vector<2x32xf32> to vector<2x32xbf16>
    %cst_17 = arith.constant dense<0.000000e+00> : vector<2x128xf32>
    %79 = tpu.matmul %78, %9, %cst_17 {dimension_numbers = #tpu.dot_dimension_numbers<[1], [0], [0], [1], [0, 0, 1, 1], [], []>} : vector<2x32xbf16>, vector<32x128xbf16>, vector<2x128xf32> -> vector<2x128xf32>
    %80 = arith.addf %77, %79 : vector<2x128xf32>
    %81 = arith.negf %80 : vector<2x128xf32>
    %82 = math.exp %81 : vector<2x128xf32>
    %cst_18 = arith.constant 1.000000e+00 : f32
    %83 = vector.broadcast %cst_18 : f32 to vector<2x128xf32>
    %84 = arith.addf %83, %82 : vector<2x128xf32>
    %85 = arith.divf %83, %84 : vector<2x128xf32>
    %86 = math.tanh %80 : vector<2x128xf32>
    %87 = vector.extract_strided_slice %85 {offsets = [0, 0], sizes = [2, 32], strides = [1, 1]} : vector<2x128xf32> to vector<2x32xf32>
    %88 = vector.extract_strided_slice %85 {offsets = [0, 32], sizes = [2, 32], strides = [1, 1]} : vector<2x128xf32> to vector<2x32xf32>
    %89 = vector.extract_strided_slice %86 {offsets = [0, 64], sizes = [2, 32], strides = [1, 1]} : vector<2x128xf32> to vector<2x32xf32>
    %90 = vector.extract_strided_slice %85 {offsets = [0, 96], sizes = [2, 32], strides = [1, 1]} : vector<2x128xf32> to vector<2x32xf32>
    %91 = arith.mulf %88, %72 : vector<2x32xf32>
    %92 = arith.mulf %87, %89 : vector<2x32xf32>
    %93 = arith.addf %91, %92 : vector<2x32xf32>
    %94 = math.tanh %93 : vector<2x32xf32>
    %95 = arith.mulf %90, %94 : vector<2x32xf32>
    %96 = arith.addf %75, %95 : vector<2x32xf32>
    %97 = vector.extract_strided_slice %8 {offsets = [0, 4, 0], sizes = [2, 1, 128], strides = [1, 1, 1]} : vector<2x8x128xf32> to vector<2x1x128xf32>
    %98 = vector.shape_cast %97 : vector<2x1x128xf32> to vector<2x128xf32>
    %99 = arith.truncf %95 : vector<2x32xf32> to vector<2x32xbf16>
    %cst_19 = arith.constant dense<0.000000e+00> : vector<2x128xf32>
    %100 = tpu.matmul %99, %9, %cst_19 {dimension_numbers = #tpu.dot_dimension_numbers<[1], [0], [0], [1], [0, 0, 1, 1], [], []>} : vector<2x32xbf16>, vector<32x128xbf16>, vector<2x128xf32> -> vector<2x128xf32>
    %101 = arith.addf %98, %100 : vector<2x128xf32>
    %102 = arith.negf %101 : vector<2x128xf32>
    %103 = math.exp %102 : vector<2x128xf32>
    %cst_20 = arith.constant 1.000000e+00 : f32
    %104 = vector.broadcast %cst_20 : f32 to vector<2x128xf32>
    %105 = arith.addf %104, %103 : vector<2x128xf32>
    %106 = arith.divf %104, %105 : vector<2x128xf32>
    %107 = math.tanh %101 : vector<2x128xf32>
    %108 = vector.extract_strided_slice %106 {offsets = [0, 0], sizes = [2, 32], strides = [1, 1]} : vector<2x128xf32> to vector<2x32xf32>
    %109 = vector.extract_strided_slice %106 {offsets = [0, 32], sizes = [2, 32], strides = [1, 1]} : vector<2x128xf32> to vector<2x32xf32>
    %110 = vector.extract_strided_slice %107 {offsets = [0, 64], sizes = [2, 32], strides = [1, 1]} : vector<2x128xf32> to vector<2x32xf32>
    %111 = vector.extract_strided_slice %106 {offsets = [0, 96], sizes = [2, 32], strides = [1, 1]} : vector<2x128xf32> to vector<2x32xf32>
    %112 = arith.mulf %109, %93 : vector<2x32xf32>
    %113 = arith.mulf %108, %110 : vector<2x32xf32>
    %114 = arith.addf %112, %113 : vector<2x32xf32>
    %115 = math.tanh %114 : vector<2x32xf32>
    %116 = arith.mulf %111, %115 : vector<2x32xf32>
    %117 = arith.addf %96, %116 : vector<2x32xf32>
    %118 = vector.extract_strided_slice %8 {offsets = [0, 5, 0], sizes = [2, 1, 128], strides = [1, 1, 1]} : vector<2x8x128xf32> to vector<2x1x128xf32>
    %119 = vector.shape_cast %118 : vector<2x1x128xf32> to vector<2x128xf32>
    %120 = arith.truncf %116 : vector<2x32xf32> to vector<2x32xbf16>
    %cst_21 = arith.constant dense<0.000000e+00> : vector<2x128xf32>
    %121 = tpu.matmul %120, %9, %cst_21 {dimension_numbers = #tpu.dot_dimension_numbers<[1], [0], [0], [1], [0, 0, 1, 1], [], []>} : vector<2x32xbf16>, vector<32x128xbf16>, vector<2x128xf32> -> vector<2x128xf32>
    %122 = arith.addf %119, %121 : vector<2x128xf32>
    %123 = arith.negf %122 : vector<2x128xf32>
    %124 = math.exp %123 : vector<2x128xf32>
    %cst_22 = arith.constant 1.000000e+00 : f32
    %125 = vector.broadcast %cst_22 : f32 to vector<2x128xf32>
    %126 = arith.addf %125, %124 : vector<2x128xf32>
    %127 = arith.divf %125, %126 : vector<2x128xf32>
    %128 = math.tanh %122 : vector<2x128xf32>
    %129 = vector.extract_strided_slice %127 {offsets = [0, 0], sizes = [2, 32], strides = [1, 1]} : vector<2x128xf32> to vector<2x32xf32>
    %130 = vector.extract_strided_slice %127 {offsets = [0, 32], sizes = [2, 32], strides = [1, 1]} : vector<2x128xf32> to vector<2x32xf32>
    %131 = vector.extract_strided_slice %128 {offsets = [0, 64], sizes = [2, 32], strides = [1, 1]} : vector<2x128xf32> to vector<2x32xf32>
    %132 = vector.extract_strided_slice %127 {offsets = [0, 96], sizes = [2, 32], strides = [1, 1]} : vector<2x128xf32> to vector<2x32xf32>
    %133 = arith.mulf %130, %114 : vector<2x32xf32>
    %134 = arith.mulf %129, %131 : vector<2x32xf32>
    %135 = arith.addf %133, %134 : vector<2x32xf32>
    %136 = math.tanh %135 : vector<2x32xf32>
    %137 = arith.mulf %132, %136 : vector<2x32xf32>
    %138 = arith.addf %117, %137 : vector<2x32xf32>
    %139 = vector.extract_strided_slice %8 {offsets = [0, 6, 0], sizes = [2, 1, 128], strides = [1, 1, 1]} : vector<2x8x128xf32> to vector<2x1x128xf32>
    %140 = vector.shape_cast %139 : vector<2x1x128xf32> to vector<2x128xf32>
    %141 = arith.truncf %137 : vector<2x32xf32> to vector<2x32xbf16>
    %cst_23 = arith.constant dense<0.000000e+00> : vector<2x128xf32>
    %142 = tpu.matmul %141, %9, %cst_23 {dimension_numbers = #tpu.dot_dimension_numbers<[1], [0], [0], [1], [0, 0, 1, 1], [], []>} : vector<2x32xbf16>, vector<32x128xbf16>, vector<2x128xf32> -> vector<2x128xf32>
    %143 = arith.addf %140, %142 : vector<2x128xf32>
    %144 = arith.negf %143 : vector<2x128xf32>
    %145 = math.exp %144 : vector<2x128xf32>
    %cst_24 = arith.constant 1.000000e+00 : f32
    %146 = vector.broadcast %cst_24 : f32 to vector<2x128xf32>
    %147 = arith.addf %146, %145 : vector<2x128xf32>
    %148 = arith.divf %146, %147 : vector<2x128xf32>
    %149 = math.tanh %143 : vector<2x128xf32>
    %150 = vector.extract_strided_slice %148 {offsets = [0, 0], sizes = [2, 32], strides = [1, 1]} : vector<2x128xf32> to vector<2x32xf32>
    %151 = vector.extract_strided_slice %148 {offsets = [0, 32], sizes = [2, 32], strides = [1, 1]} : vector<2x128xf32> to vector<2x32xf32>
    %152 = vector.extract_strided_slice %149 {offsets = [0, 64], sizes = [2, 32], strides = [1, 1]} : vector<2x128xf32> to vector<2x32xf32>
    %153 = vector.extract_strided_slice %148 {offsets = [0, 96], sizes = [2, 32], strides = [1, 1]} : vector<2x128xf32> to vector<2x32xf32>
    %154 = arith.mulf %151, %135 : vector<2x32xf32>
    %155 = arith.mulf %150, %152 : vector<2x32xf32>
    %156 = arith.addf %154, %155 : vector<2x32xf32>
    %157 = math.tanh %156 : vector<2x32xf32>
    %158 = arith.mulf %153, %157 : vector<2x32xf32>
    %159 = arith.addf %138, %158 : vector<2x32xf32>
    %160 = vector.extract_strided_slice %8 {offsets = [0, 7, 0], sizes = [2, 1, 128], strides = [1, 1, 1]} : vector<2x8x128xf32> to vector<2x1x128xf32>
    %161 = vector.shape_cast %160 : vector<2x1x128xf32> to vector<2x128xf32>
    %162 = arith.truncf %158 : vector<2x32xf32> to vector<2x32xbf16>
    %cst_25 = arith.constant dense<0.000000e+00> : vector<2x128xf32>
    %163 = tpu.matmul %162, %9, %cst_25 {dimension_numbers = #tpu.dot_dimension_numbers<[1], [0], [0], [1], [0, 0, 1, 1], [], []>} : vector<2x32xbf16>, vector<32x128xbf16>, vector<2x128xf32> -> vector<2x128xf32>
    %164 = arith.addf %161, %163 : vector<2x128xf32>
    %165 = arith.negf %164 : vector<2x128xf32>
    %166 = math.exp %165 : vector<2x128xf32>
    %cst_26 = arith.constant 1.000000e+00 : f32
    %167 = vector.broadcast %cst_26 : f32 to vector<2x128xf32>
    %168 = arith.addf %167, %166 : vector<2x128xf32>
    %169 = arith.divf %167, %168 : vector<2x128xf32>
    %170 = math.tanh %164 : vector<2x128xf32>
    %171 = vector.extract_strided_slice %169 {offsets = [0, 0], sizes = [2, 32], strides = [1, 1]} : vector<2x128xf32> to vector<2x32xf32>
    %172 = vector.extract_strided_slice %169 {offsets = [0, 32], sizes = [2, 32], strides = [1, 1]} : vector<2x128xf32> to vector<2x32xf32>
    %173 = vector.extract_strided_slice %170 {offsets = [0, 64], sizes = [2, 32], strides = [1, 1]} : vector<2x128xf32> to vector<2x32xf32>
    %174 = vector.extract_strided_slice %169 {offsets = [0, 96], sizes = [2, 32], strides = [1, 1]} : vector<2x128xf32> to vector<2x32xf32>
    %175 = arith.mulf %172, %156 : vector<2x32xf32>
    %176 = arith.mulf %171, %173 : vector<2x32xf32>
    %177 = arith.addf %175, %176 : vector<2x32xf32>
    %178 = math.tanh %177 : vector<2x32xf32>
    %179 = arith.mulf %174, %178 : vector<2x32xf32>
    %180 = arith.addf %159, %179 : vector<2x32xf32>
    %cst_27 = arith.constant 1.250000e-01 : f32
    %181 = vector.broadcast %cst_27 : f32 to vector<2x32xf32>
    %182 = arith.mulf %180, %181 : vector<2x32xf32>
    %183 = arith.truncf %182 : vector<2x32xf32> to vector<2x32xbf16>
    %c0_28 = arith.constant 0 : index
    %c0_29 = arith.constant 0 : index
    %184 = vector.load %arg4[%c0_28, %c0_29] : memref<32x16xbf16, #tpu.memory_space<vmem>>, vector<32x16xbf16>
    %cst_30 = arith.constant dense<0.000000e+00> : vector<2x16xf32>
    %185 = tpu.matmul %183, %184, %cst_30 {dimension_numbers = #tpu.dot_dimension_numbers<[1], [0], [0], [1], [0, 0, 1, 1], [], []>} : vector<2x32xbf16>, vector<32x16xbf16>, vector<2x16xf32> -> vector<2x16xf32>
    %c0_31 = arith.constant 0 : index
    %c0_32 = arith.constant 0 : index
    %186 = vector.load %arg5[%c0_31, %c0_32] : memref<1x16xf32, #tpu.memory_space<vmem>>, vector<1x16xf32>
    %187 = vector.broadcast %186 : vector<1x16xf32> to vector<2x16xf32>
    %188 = arith.addf %185, %187 : vector<2x16xf32>
    %c0_33 = arith.constant 0 : index
    %c0_34 = arith.constant 0 : index
    %189 = vector.load %arg6[%c0_33, %c0_34] : memref<2x16xf32, #tpu.memory_space<vmem>>, vector<2x16xf32>
    tpu.vector_store %arg6[%c0_33, %c0_34], %188 {strides = array<i32>} : memref<2x16xf32, #tpu.memory_space<vmem>>, vector<2x16xf32>,
    return
  }
}

</mosaic_0001>

<llo_original>
// kernel: lstm_net_forward.1
$region0: #{lstm_net_forward.1}
  #allocation0 [shape = 'u32[]', space=smem, size = 0x4, offset = 0x4, fixed_abs, tag = 'smem constant byte address 0x4 - core index']
  #allocation1 [shape = 'u32[144,128]{1,0:T(1,128)}', space=vmem, size = 0x12000, scoped, tag = 'internal scratch']
  %s0 = inlined_call_operand.vmem [shape: f32[2,8,16], index: 0, kind: input, shape index: {}]
  %s1 = inlined_call_operand.vmem [shape: bf16[16,128], index: 1, kind: input, shape index: {}]
  %s2 = inlined_call_operand.vmem [shape: bf16[32,128], index: 2, kind: input, shape index: {}]
  %s3 = inlined_call_operand.vmem [shape: f32[1,128], index: 3, kind: input, shape index: {}]
  %s4 = inlined_call_operand.vmem [shape: bf16[32,16], index: 4, kind: input, shape index: {}]
  %s5 = inlined_call_operand.vmem [shape: f32[1,16], index: 5, kind: input, shape index: {}]
  %s6 = inlined_call_operand.hbm [shape: f32[2,16], index: 6, kind: output, shape index: {}]
  %s7 = sld [smem:[#allocation0]]
  $region34: #{lstm_net_forward.1} parent=0
    _
  %s9 = ssub.s32 1, %s7
  %s10 = scalar_select 0, %s9, %s7
  $region1: #{lstm_net_forward.1} parent=0
    #allocation2 [shape = 'u8[1024]{0}', space=vmem, size = 0x400, scoped, tag = 'output window, operand 0, single buffered']
    #allocation3 [shape = 's32[1]{0}', space=sflag, size = 0x4, scoped, tag = 'scoped memory for lstm_net_forward.1']
    %11 = vsyncpa [#allocation3], 0
    // Predicated region
    $region2: #{lstm_net_forward.1} parent=1 // pred_check
      _
    $region3: #{lstm_net_forward.1} parent=1 // pred_check_branch
      %13 = sbr.rel (0) target = $region5
    $region4: #{lstm_net_forward.1} parent=1 // pred_region
      _
    $region5: #{lstm_net_forward.1} parent=1 // pred_fallthru
      _
    // Predicated region
    $region6: #{lstm_net_forward.1} parent=1 // pred_check
      _
    $region7: #{lstm_net_forward.1} parent=1 // pred_check_branch
      %15 = sbr.rel (0) target = $region9
    $region8: #{lstm_net_forward.1} parent=1 // pred_region
      _
    $region9: #{lstm_net_forward.1} parent=1 // pred_fallthru
      _
    // Predicated region
    $region10: #{lstm_net_forward.1} parent=1 // pred_check
      _
    $region11: #{lstm_net_forward.1} parent=1 // pred_check_branch
      %17 = sbr.rel (0) target = $region13
    $region12: #{lstm_net_forward.1} parent=1 // pred_region
      _
    $region13: #{lstm_net_forward.1} parent=1 // pred_fallthru
      _
    // Predicated region
    $region14: #{lstm_net_forward.1} parent=1 // pred_check
      _
    $region15: #{lstm_net_forward.1} parent=1 // pred_check_branch
      %19 = sbr.rel (0) target = $region17
    $region16: #{lstm_net_forward.1} parent=1 // pred_region
      _
    $region17: #{lstm_net_forward.1} parent=1 // pred_fallthru
      _
    // Predicated region
    $region18: #{lstm_net_forward.1} parent=1 // pred_check
      _
    $region19: #{lstm_net_forward.1} parent=1 // pred_check_branch
      %21 = sbr.rel (0) target = $region21
    $region20: #{lstm_net_forward.1} parent=1 // pred_region
      _
    $region21: #{lstm_net_forward.1} parent=1 // pred_fallthru
      _
    // Predicated region
    $region22: #{lstm_net_forward.1} parent=1 // pred_check
      _
    $region23: #{lstm_net_forward.1} parent=1 // pred_check_branch
      %23 = sbr.rel (0) target = $region25
    $region24: #{lstm_net_forward.1} parent=1 // pred_region
      _
    $region25: #{lstm_net_forward.1} parent=1 // pred_fallthru
      _
    %v25 = vld [vmem:[%s0] sm:$0xff]
    %v26 = vld [vmem:[%s0 + $0x8] sm:$0xff]
    %v27 = vpack.c.bf16 %v26, %v25
    %v28 = vld [vmem:[%s1] sm:$0xf]
    %v29 = vld [vmem:[%s1 + $0x4] sm:$0xf]
    %v30 = vld [vmem:[%s3] sm:$0x1]
    %v32 = vlaneseq
    %v33 = vshrl.u32 %v32, 7
    %v34 = vsub.s32 0, %v33
    %v35 = vrot.slane %v30, %v34
    %v39 = vunpack.c.l.b16 %v28
    %v40 = vunpack.c.l.b16 %v29
    %v41 = vpack.c.b16 %v40, %v39
    %vm43 = vcmask 130048
    %v45 = vsel %vm43, %v27, 0
    %47 = vmatprep.subr.bf16.mxu0 0
    %48 = vmatpush1.bf16.msra.mxu0 %v41
    %49 = vmatprep.subr.bf16.mxu0 0
    %50 = vmatpush1.bf16.msra.mxu0 0
    %51 = vmatprep.subr.bf16.mxu0 0
    %52 = vmatpush1.bf16.msra.mxu0 0
    %53 = vmatprep.subr.bf16.mxu0 0
    %54 = vmatpush1.bf16.msra.mxu0 0
    %55 = vmatprep.subr.bf16.mxu0 0
    %56 = vmatpush1.bf16.msra.mxu0 0
    %57 = vmatprep.subr.bf16.mxu0 0
    %58 = vmatpush1.bf16.msra.mxu0 0
    %59 = vmatprep.subr.bf16.mxu0 0
    %60 = vmatpush1.bf16.msra.mxu0 0
    %61 = vmatprep.subr.bf16.mxu0 0
    %62 = vmatpush1.bf16.msra.mxu0 0
    %63 = vmatprep.subr.bf16.mxu0 0
    %64 = vmatpush1.bf16.msra.mxu0 0
    %65 = vmatprep.subr.bf16.mxu0 0
    %66 = vmatpush1.bf16.msra.mxu0 0
    %67 = vmatprep.subr.bf16.mxu0 0
    %68 = vmatpush1.bf16.msra.mxu0 0
    %69 = vmatprep.subr.bf16.mxu0 0
    %70 = vmatpush1.bf16.msra.mxu0 0
    %71 = vmatprep.subr.bf16.mxu0 0
    %72 = vmatpush1.bf16.msra.mxu0 0
    %73 = vmatprep.subr.bf16.mxu0 0
    %74 = vmatpush1.bf16.msra.mxu0 0
    %75 = vmatprep.subr.bf16.mxu0 0
    %76 = vmatpush1.bf16.msra.mxu0 0
    %77 = vmatprep.subr.bf16.mxu0 0
    %78 = vmatpush1.bf16.msra.mxu0 0
    %79 = vmatprep.mubr.bf16.mxu0 0
    %80 = vmatmul.mubr.bf16.gmra.mrb[0].mxu0 %v45
    %v81 = vpop.f32.mrb[0].mxu0
    %v82 = vadd.f32 %v35, %v81
    %v83 = vpop.f32.mrb[0].mxu0
    %v84 = vpop.f32.mrb[0].mxu0
    %v85 = vadd.f32 %v35, %v84
    %v86 = vpop.f32.mrb[0].mxu0
    %87 = vdwg.mxu0
    %v88 = vld [vmem:[%s2] sm:$0xf]
    %v89 = vld [vmem:[%s2 + $0x4] sm:$0xf]
    %v90 = vld [vmem:[%s2 + $0x8] sm:$0xf]
    %v91 = vld [vmem:[%s2 + $0xc] sm:$0xf]
    %v96 = vunpack.c.l.b16 %v88
    %v97 = vunpack.c.l.b16 %v89
    %v98 = vunpack.c.l.b16 %v90
    %v99 = vunpack.c.l.b16 %v91
    %v100 = vpack.c.b16 %v97, %v96
    %v101 = vpack.c.b16 %v99, %v98
    %vm104 = vcmask 261120
    %v106 = vsel %vm104, 0, 0
    %108 = vmatprep.subr.bf16.mxu0 0
    %109 = vmatpush1.bf16.msra.mxu0 %v100
    %110 = vmatprep.subr.bf16.mxu0 0
    %111 = vmatpush1.bf16.msra.mxu0 %v101
    %112 = vmatprep.subr.bf16.mxu0 0
    %113 = vmatpush1.bf16.msra.mxu0 0
    %114 = vmatprep.subr.bf16.mxu0 0
    %115 = vmatpush1.bf16.msra.mxu0 0
    %116 = vmatprep.subr.bf16.mxu0 0
    %117 = vmatpush1.bf16.msra.mxu0 0
    %118 = vmatprep.subr.bf16.mxu0 0
    %119 = vmatpush1.bf16.msra.mxu0 0
    %120 = vmatprep.subr.bf16.mxu0 0
    %121 = vmatpush1.bf16.msra.mxu0 0
    %122 = vmatprep.subr.bf16.mxu0 0
    %123 = vmatpush1.bf16.msra.mxu0 0
    %124 = vmatprep.subr.bf16.mxu0 0
    %125 = vmatpush1.bf16.msra.mxu0 0
    %126 = vmatprep.subr.bf16.mxu0 0
    %127 = vmatpush1.bf16.msra.mxu0 0
    %128 = vmatprep.subr.bf16.mxu0 0
    %129 = vmatpush1.bf16.msra.mxu0 0
    %130 = vmatprep.subr.bf16.mxu0 0
    %131 = vmatpush1.bf16.msra.mxu0 0
    %132 = vmatprep.subr.bf16.mxu0 0
    %133 = vmatpush1.bf16.msra.mxu0 0
    %134 = vmatprep.subr.bf16.mxu0 0
    %135 = vmatpush1.bf16.msra.mxu0 0
    %136 = vmatprep.subr.bf16.mxu0 0
    %137 = vmatpush1.bf16.msra.mxu0 0
    %138 = vmatprep.subr.bf16.mxu0 0
    %139 = vmatpush1.bf16.msra.mxu0 0
    %140 = vmatprep.mubr.bf16.mxu0 0
    %141 = vmatmul.mubr.bf16.gmra.mrb[0].mxu0 %v106
    %v142 = vpop.f32.mrb[0].mxu0
    %v143 = vadd.f32 0.0, %v142
    %v144 = vpop.f32.mrb[0].mxu0
    %v145 = vpop.f32.mrb[0].mxu0
    %v146 = vpop.f32.mrb[0].mxu0
    %147 = vdwg.mxu0
    %v149 = vrot.slane %v143, 1
    %v152 = vadd.f32 %v82, %v143
    %v153 = vadd.f32 %v85, %v149
    %v154 = vxor.u32 %v152, 2147483648
    %v155 = vxor.u32 %v153, 2147483648
    %v156 = vmul.f32 %v154, 1.442695
    %v157 = vpow.pop %v156
    %v158 = vmul.f32 %v155, 1.442695
    %v159 = vpow.pop %v158
    %v160 = vadd.f32 %v157, 1.0
    %v161 = vadd.f32 %v159, 1.0
    %v162 = vrcp.pop %v160
    %v163 = vmul.f32 1.0, %v162
    %v164 = vrcp.pop %v161
    %v165 = vmul.f32 1.0, %v164
    %v166 = vtanh.pop %v152
    %v167 = vtanh.pop %v153
    %v168 = vmul.f32 %v163, 0.0
    %v169 = vmul.f32 %v165, 0.0
    %172 = vrot.lane.b32.xlu0 %v166, 64
    %v173 = vpop.permute.xlu0 %172
    %174 = vrot.lane.b32.xlu0 %v167, 64
    %v175 = vpop.permute.xlu0 %174
    %v178 = vmul.f32 %v163, %v173
    %v179 = vmul.f32 %v165, %v175
    %182 = vrot.lane.b32.xlu0 %v178, 32
    %v183 = vpop.permute.xlu0 %182
    %184 = vrot.lane.b32.xlu0 %v179, 32
    %v185 = vpop.permute.xlu0 %184
    %v188 = vadd.f32 %v168, %v183
    %v189 = vadd.f32 %v169, %v185
    %v190 = vtanh.pop %v188
    %v191 = vtanh.pop %v189
    %194 = vrot.lane.b32.xlu0 %v190, 64
    %v195 = vpop.permute.xlu0 %194
    %196 = vrot.lane.b32.xlu0 %v191, 64
    %v197 = vpop.permute.xlu0 %196
    %v200 = vmul.f32 %v163, %v195
    %v201 = vmul.f32 %v165, %v197
    %v202 = vadd.f32 %v200, 0.0
    %v203 = vadd.f32 %v201, 0.0
    %v204 = vpack.c.bf16 %v200, %v200
    %v205 = vpack.c.bf16 %v201, %v201
    %v208 = vunpack.c.l.b16 %v204
    %v209 = vunpack.c.l.b16 %v205
    %v210 = vrot.slane %v209, 7
    %vm211 = vcmask 1041409
    %v212 = vsel %vm211, %v210, %v208
    %v213 = vpack.c.b16 %v212, %v212
    %214 = vrot.lane.b32.xlu0 %v213, 32
    %v215 = vpop.permute.xlu0 %214
    %v217 = vsel %vm104, %v215, 0
    %219 = vmatprep.subr.bf16.mxu0 0
    %220 = vmatpush1.bf16.msra.mxu0 %v100
    %221 = vmatprep.subr.bf16.mxu0 0
    %222 = vmatpush1.bf16.msra.mxu0 %v101
    %223 = vmatprep.subr.bf16.mxu0 0
    %224 = vmatpush1.bf16.msra.mxu0 0
    %225 = vmatprep.subr.bf16.mxu0 0
    %226 = vmatpush1.bf16.msra.mxu0 0
    %227 = vmatprep.subr.bf16.mxu0 0
    %228 = vmatpush1.bf16.msra.mxu0 0
    %229 = vmatprep.subr.bf16.mxu0 0
    %230 = vmatpush1.bf16.msra.mxu0 0
    %231 = vmatprep.subr.bf16.mxu0 0
    %232 = vmatpush1.bf16.msra.mxu0 0
    %233 = vmatprep.subr.bf16.mxu0 0
    %234 = vmatpush1.bf16.msra.mxu0 0
    %235 = vmatprep.subr.bf16.mxu0 0
    %236 = vmatpush1.bf16.msra.mxu0 0
    %237 = vmatprep.subr.bf16.mxu0 0
    %238 = vmatpush1.bf16.msra.mxu0 0
    %239 = vmatprep.subr.bf16.mxu0 0
    %240 = vmatpush1.bf16.msra.mxu0 0
    %241 = vmatprep.subr.bf16.mxu0 0
    %242 = vmatpush1.bf16.msra.mxu0 0
    %243 = vmatprep.subr.bf16.mxu0 0
    %244 = vmatpush1.bf16.msra.mxu0 0
    %245 = vmatprep.subr.bf16.mxu0 0
    %246 = vmatpush1.bf16.msra.mxu0 0
    %247 = vmatprep.subr.bf16.mxu0 0
    %248 = vmatpush1.bf16.msra.mxu0 0
    %249 = vmatprep.subr.bf16.mxu0 0
    %250 = vmatpush1.bf16.msra.mxu0 0
    %251 = vmatprep.mubr.bf16.mxu0 0
    %252 = vmatmul.mubr.bf16.gmra.mrb[0].mxu0 %v217
    %v253 = vpop.f32.mrb[0].mxu0
    %v254 = vadd.f32 0.0, %v253
    %v255 = vpop.f32.mrb[0].mxu0
    %v256 = vpop.f32.mrb[0].mxu0
    %v257 = vpop.f32.mrb[0].mxu0
    %258 = vdwg.mxu0
    %v260 = vrot.slane %v254, 7
    %v263 = vadd.f32 %v82, %v260
    %v264 = vadd.f32 %v85, %v254
    %v265 = vxor.u32 %v263, 2147483648
    %v266 = vxor.u32 %v264, 2147483648
    %v267 = vmul.f32 %v265, 1.442695
    %v268 = vpow.pop %v267
    %v269 = vmul.f32 %v266, 1.442695
    %v270 = vpow.pop %v269
    %v271 = vadd.f32 %v268, 1.0
    %v272 = vadd.f32 %v270, 1.0
    %v273 = vrcp.pop %v271
    %v274 = vmul.f32 1.0, %v273
    %v275 = vrcp.pop %v272
    %v276 = vmul.f32 1.0, %v275
    %v277 = vtanh.pop %v263
    %v278 = vtanh.pop %v264
    %v281 = vrot.slane %v188, 7
    %v282 = vrot.slane %v189, 7
    %v285 = vmul.f32 %v274, %v281
    %v286 = vmul.f32 %v276, %v282
    %289 = vrot.lane.b32.xlu0 %v277, 64
    %v290 = vpop.permute.xlu0 %289
    %291 = vrot.lane.b32.xlu0 %v278, 64
    %v292 = vpop.permute.xlu0 %291
    %v295 = vmul.f32 %v274, %v290
    %v296 = vmul.f32 %v276, %v292
    %299 = vrot.lane.b32.xlu0 %v295, 32
    %v300 = vpop.permute.xlu0 %299
    %301 = vrot.lane.b32.xlu0 %v296, 32
    %v302 = vpop.permute.xlu0 %301
    %v305 = vadd.f32 %v285, %v300
    %v306 = vadd.f32 %v286, %v302
    %v307 = vtanh.pop %v305
    %v308 = vtanh.pop %v306
    %311 = vrot.lane.b32.xlu0 %v307, 64
    %v312 = vpop.permute.xlu0 %311
    %313 = vrot.lane.b32.xlu0 %v308, 64
    %v314 = vpop.permute.xlu0 %313
    %v317 = vmul.f32 %v274, %v312
    %v318 = vmul.f32 %v276, %v314
    %v321 = vrot.slane %v317, 1
    %v322 = vrot.slane %v318, 1
    %v325 = vadd.f32 %v202, %v321
    %v326 = vadd.f32 %v203, %v322
    %v327 = vpack.c.bf16 %v317, %v317
    %v328 = vpack.c.bf16 %v318, %v318
    %v331 = vunpack.c.l.b16 %v327
    %v332 = vunpack.c.l.b16 %v328
    %v333 = vrot.slane %v331, 1
    %v334 = vsel %vm211, %v332, %v333
    %v335 = vpack.c.b16 %v334, %v334
    %336 = vrot.lane.b32.xlu0 %v335, 32
    %v337 = vpop.permute.xlu0 %336
    %v339 = vsel %vm104, %v337, 0
    %341 = vmatprep.subr.bf16.mxu0 0
    %342 = vmatpush1.bf16.msra.mxu0 %v100
    %343 = vmatprep.subr.bf16.mxu0 0
    %344 = vmatpush1.bf16.msra.mxu0 %v101
    %345 = vmatprep.subr.bf16.mxu0 0
    %346 = vmatpush1.bf16.msra.mxu0 0
    %347 = vmatprep.subr.bf16.mxu0 0
    %348 = vmatpush1.bf16.msra.mxu0 0
    %349 = vmatprep.subr.bf16.mxu0 0
    %350 = vmatpush1.bf16.msra.mxu0 0
    %351 = vmatprep.subr.bf16.mxu0 0
    %352 = vmatpush1.bf16.msra.mxu0 0
    %353 = vmatprep.subr.bf16.mxu0 0
    %354 = vmatpush1.bf16.msra.mxu0 0
    %355 = vmatprep.subr.bf16.mxu0 0
    %356 = vmatpush1.bf16.msra.mxu0 0
    %357 = vmatprep.subr.bf16.mxu0 0
    %358 = vmatpush1.bf16.msra.mxu0 0
    %359 = vmatprep.subr.bf16.mxu0 0
    %360 = vmatpush1.bf16.msra.mxu0 0
    %361 = vmatprep.subr.bf16.mxu0 0
    %362 = vmatpush1.bf16.msra.mxu0 0
    %363 = vmatprep.subr.bf16.mxu0 0
    %364 = vmatpush1.bf16.msra.mxu0 0
    %365 = vmatprep.subr.bf16.mxu0 0
    %366 = vmatpush1.bf16.msra.mxu0 0
    %367 = vmatprep.subr.bf16.mxu0 0
    %368 = vmatpush1.bf16.msra.mxu0 0
    %369 = vmatprep.subr.bf16.mxu0 0
    %370 = vmatpush1.bf16.msra.mxu0 0
    %371 = vmatprep.subr.bf16.mxu0 0
    %372 = vmatpush1.bf16.msra.mxu0 0
    %373 = vmatprep.mubr.bf16.mxu0 0
    %374 = vmatmul.mubr.bf16.gmra.mrb[0].mxu0 %v339
    %v375 = vpop.f32.mrb[0].mxu0
    %v376 = vadd.f32 0.0, %v375
    %v377 = vpop.f32.mrb[0].mxu0
    %v378 = vpop.f32.mrb[0].mxu0
    %v379 = vpop.f32.mrb[0].mxu0
    %380 = vdwg.mxu0
    %v382 = vrot.slane %v376, 6
    %v383 = vrot.slane %v376, 7
    %v386 = vadd.f32 %v82, %v382
    %v387 = vadd.f32 %v85, %v383
    %v388 = vxor.u32 %v386, 2147483648
    %v389 = vxor.u32 %v387, 2147483648
    %v390 = vmul.f32 %v388, 1.442695
    %v391 = vpow.pop %v390
    %v392 = vmul.f32 %v389, 1.442695
    %v393 = vpow.pop %v392
    %v394 = vadd.f32 %v391, 1.0
    %v395 = vadd.f32 %v393, 1.0
    %v396 = vrcp.pop %v394
    %v397 = vmul.f32 1.0, %v396
    %v398 = vrcp.pop %v395
    %v399 = vmul.f32 1.0, %v398
    %v400 = vtanh.pop %v386
    %v401 = vtanh.pop %v387
    %v404 = vrot.slane %v305, 7
    %v405 = vrot.slane %v306, 7
    %v408 = vmul.f32 %v397, %v404
    %v409 = vmul.f32 %v399, %v405
    %412 = vrot.lane.b32.xlu0 %v400, 64
    %v413 = vpop.permute.xlu0 %412
    %414 = vrot.lane.b32.xlu0 %v401, 64
    %v415 = vpop.permute.xlu0 %414
    %v418 = vmul.f32 %v397, %v413
    %v419 = vmul.f32 %v399, %v415
    %422 = vrot.lane.b32.xlu0 %v418, 32
    %v423 = vpop.permute.xlu0 %422
    %424 = vrot.lane.b32.xlu0 %v419, 32
    %v425 = vpop.permute.xlu0 %424
    %v428 = vadd.f32 %v408, %v423
    %v429 = vadd.f32 %v409, %v425
    %v430 = vtanh.pop %v428
    %v431 = vtanh.pop %v429
    %434 = vrot.lane.b32.xlu0 %v430, 64
    %v435 = vpop.permute.xlu0 %434
    %436 = vrot.lane.b32.xlu0 %v431, 64
    %v437 = vpop.permute.xlu0 %436
    %v440 = vmul.f32 %v397, %v435
    %v441 = vmul.f32 %v399, %v437
    %v444 = vrot.slane %v440, 2
    %v445 = vrot.slane %v441, 2
    %v448 = vadd.f32 %v325, %v444
    %v449 = vadd.f32 %v326, %v445
    %v450 = vpack.c.bf16 %v440, %v440
    %v451 = vpack.c.bf16 %v441, %v441
    %v454 = vunpack.c.l.b16 %v450
    %v455 = vunpack.c.l.b16 %v451
    %v456 = vrot.slane %v454, 2
    %v457 = vrot.slane %v455, 1
    %v458 = vsel %vm211, %v457, %v456
    %v459 = vpack.c.b16 %v458, %v458
    %460 = vrot.lane.b32.xlu0 %v459, 32
    %v461 = vpop.permute.xlu0 %460
    %v463 = vsel %vm104, %v461, 0
    %465 = vmatprep.subr.bf16.mxu0 0
    %466 = vmatpush1.bf16.msra.mxu0 %v100
    %467 = vmatprep.subr.bf16.mxu0 0
    %468 = vmatpush1.bf16.msra.mxu0 %v101
    %469 = vmatprep.subr.bf16.mxu0 0
    %470 = vmatpush1.bf16.msra.mxu0 0
    %471 = vmatprep.subr.bf16.mxu0 0
    %472 = vmatpush1.bf16.msra.mxu0 0
    %473 = vmatprep.subr.bf16.mxu0 0
    %474 = vmatpush1.bf16.msra.mxu0 0
    %475 = vmatprep.subr.bf16.mxu0 0
    %476 = vmatpush1.bf16.msra.mxu0 0
    %477 = vmatprep.subr.bf16.mxu0 0
    %478 = vmatpush1.bf16.msra.mxu0 0
    %479 = vmatprep.subr.bf16.mxu0 0
    %480 = vmatpush1.bf16.msra.mxu0 0
    %481 = vmatprep.subr.bf16.mxu0 0
    %482 = vmatpush1.bf16.msra.mxu0 0
    %483 = vmatprep.subr.bf16.mxu0 0
    %484 = vmatpush1.bf16.msra.mxu0 0
    %485 = vmatprep.subr.bf16.mxu0 0
    %486 = vmatpush1.bf16.msra.mxu0 0
    %487 = vmatprep.subr.bf16.mxu0 0
    %488 = vmatpush1.bf16.msra.mxu0 0
    %489 = vmatprep.subr.bf16.mxu0 0
    %490 = vmatpush1.bf16.msra.mxu0 0
    %491 = vmatprep.subr.bf16.mxu0 0
    %492 = vmatpush1.bf16.msra.mxu0 0
    %493 = vmatprep.subr.bf16.mxu0 0
    %494 = vmatpush1.bf16.msra.mxu0 0
    %495 = vmatprep.subr.bf16.mxu0 0
    %496 = vmatpush1.bf16.msra.mxu0 0
    %497 = vmatprep.mubr.bf16.mxu0 0
    %498 = vmatmul.mubr.bf16.gmra.mrb[0].mxu0 %v463
    %v499 = vpop.f32.mrb[0].mxu0
    %v500 = vadd.f32 0.0, %v499
    %v501 = vpop.f32.mrb[0].mxu0
    %v502 = vpop.f32.mrb[0].mxu0
    %v503 = vpop.f32.mrb[0].mxu0
    %504 = vdwg.mxu0
    %v506 = vrot.slane %v500, 5
    %v507 = vrot.slane %v500, 6
    %v510 = vadd.f32 %v82, %v506
    %v511 = vadd.f32 %v85, %v507
    %v512 = vxor.u32 %v510, 2147483648
    %v513 = vxor.u32 %v511, 2147483648
    %v514 = vmul.f32 %v512, 1.442695
    %v515 = vpow.pop %v514
    %v516 = vmul.f32 %v513, 1.442695
    %v517 = vpow.pop %v516
    %v518 = vadd.f32 %v515, 1.0
    %v519 = vadd.f32 %v517, 1.0
    %v520 = vrcp.pop %v518
    %v521 = vmul.f32 1.0, %v520
    %v522 = vrcp.pop %v519
    %v523 = vmul.f32 1.0, %v522
    %v524 = vtanh.pop %v510
    %v525 = vtanh.pop %v511
    %v528 = vrot.slane %v428, 7
    %v529 = vrot.slane %v429, 7
    %v532 = vmul.f32 %v521, %v528
    %v533 = vmul.f32 %v523, %v529
    %536 = vrot.lane.b32.xlu0 %v524, 64
    %v537 = vpop.permute.xlu0 %536
    %538 = vrot.lane.b32.xlu0 %v525, 64
    %v539 = vpop.permute.xlu0 %538
    %v542 = vmul.f32 %v521, %v537
    %v543 = vmul.f32 %v523, %v539
    %546 = vrot.lane.b32.xlu0 %v542, 32
    %v547 = vpop.permute.xlu0 %546
    %548 = vrot.lane.b32.xlu0 %v543, 32
    %v549 = vpop.permute.xlu0 %548
    %v552 = vadd.f32 %v532, %v547
    %v553 = vadd.f32 %v533, %v549
    %v554 = vtanh.pop %v552
    %v555 = vtanh.pop %v553
    %558 = vrot.lane.b32.xlu0 %v554, 64
    %v559 = vpop.permute.xlu0 %558
    %560 = vrot.lane.b32.xlu0 %v555, 64
    %v561 = vpop.permute.xlu0 %560
    %v564 = vmul.f32 %v521, %v559
    %v565 = vmul.f32 %v523, %v561
    %v568 = vrot.slane %v564, 3
    %v569 = vrot.slane %v565, 3
    %v572 = vadd.f32 %v448, %v568
    %v573 = vadd.f32 %v449, %v569
    %v574 = vpack.c.bf16 %v564, %v564
    %v575 = vpack.c.bf16 %v565, %v565
    %v578 = vunpack.c.l.b16 %v574
    %v579 = vunpack.c.l.b16 %v575
    %v580 = vrot.slane %v578, 3
    %v581 = vrot.slane %v579, 2
    %v582 = vsel %vm211, %v581, %v580
    %v583 = vpack.c.b16 %v582, %v582
    %584 = vrot.lane.b32.xlu0 %v583, 32
    %v585 = vpop.permute.xlu0 %584
    %v587 = vsel %vm104, %v585, 0
    %589 = vmatprep.subr.bf16.mxu0 0
    %590 = vmatpush1.bf16.msra.mxu0 %v100
    %591 = vmatprep.subr.bf16.mxu0 0
    %592 = vmatpush1.bf16.msra.mxu0 %v101
    %593 = vmatprep.subr.bf16.mxu0 0
    %594 = vmatpush1.bf16.msra.mxu0 0
    %595 = vmatprep.subr.bf16.mxu0 0
    %596 = vmatpush1.bf16.msra.mxu0 0
    %597 = vmatprep.subr.bf16.mxu0 0
    %598 = vmatpush1.bf16.msra.mxu0 0
    %599 = vmatprep.subr.bf16.mxu0 0
    %600 = vmatpush1.bf16.msra.mxu0 0
    %601 = vmatprep.subr.bf16.mxu0 0
    %602 = vmatpush1.bf16.msra.mxu0 0
    %603 = vmatprep.subr.bf16.mxu0 0
    %604 = vmatpush1.bf16.msra.mxu0 0
    %605 = vmatprep.subr.bf16.mxu0 0
    %606 = vmatpush1.bf16.msra.mxu0 0
    %607 = vmatprep.subr.bf16.mxu0 0
    %608 = vmatpush1.bf16.msra.mxu0 0
    %609 = vmatprep.subr.bf16.mxu0 0
    %610 = vmatpush1.bf16.msra.mxu0 0
    %611 = vmatprep.subr.bf16.mxu0 0
    %612 = vmatpush1.bf16.msra.mxu0 0
    %613 = vmatprep.subr.bf16.mxu0 0
    %614 = vmatpush1.bf16.msra.mxu0 0
    %615 = vmatprep.subr.bf16.mxu0 0
    %616 = vmatpush1.bf16.msra.mxu0 0
    %617 = vmatprep.subr.bf16.mxu0 0
    %618 = vmatpush1.bf16.msra.mxu0 0
    %619 = vmatprep.subr.bf16.mxu0 0
    %620 = vmatpush1.bf16.msra.mxu0 0
    %621 = vmatprep.mubr.bf16.mxu0 0
    %622 = vmatmul.mubr.bf16.gmra.mrb[0].mxu0 %v587
    %v623 = vpop.f32.mrb[0].mxu0
    %v624 = vadd.f32 0.0, %v623
    %v625 = vpop.f32.mrb[0].mxu0
    %v626 = vpop.f32.mrb[0].mxu0
    %v627 = vpop.f32.mrb[0].mxu0
    %628 = vdwg.mxu0
    %v630 = vrot.slane %v624, 4
    %v631 = vrot.slane %v624, 5
    %v634 = vadd.f32 %v82, %v630
    %v635 = vadd.f32 %v85, %v631
    %v636 = vxor.u32 %v634, 2147483648
    %v637 = vxor.u32 %v635, 2147483648
    %v638 = vmul.f32 %v636, 1.442695
    %v639 = vpow.pop %v638
    %v640 = vmul.f32 %v637, 1.442695
    %v641 = vpow.pop %v640
    %v642 = vadd.f32 %v639, 1.0
    %v643 = vadd.f32 %v641, 1.0
    %v644 = vrcp.pop %v642
    %v645 = vmul.f32 1.0, %v644
    %v646 = vrcp.pop %v643
    %v647 = vmul.f32 1.0, %v646
    %v648 = vtanh.pop %v634
    %v649 = vtanh.pop %v635
    %v652 = vrot.slane %v552, 7
    %v653 = vrot.slane %v553, 7
    %v656 = vmul.f32 %v645, %v652
    %v657 = vmul.f32 %v647, %v653
    %660 = vrot.lane.b32.xlu0 %v648, 64
    %v661 = vpop.permute.xlu0 %660
    %662 = vrot.lane.b32.xlu0 %v649, 64
    %v663 = vpop.permute.xlu0 %662
    %v666 = vmul.f32 %v645, %v661
    %v667 = vmul.f32 %v647, %v663
    %670 = vrot.lane.b32.xlu0 %v666, 32
    %v671 = vpop.permute.xlu0 %670
    %672 = vrot.lane.b32.xlu0 %v667, 32
    %v673 = vpop.permute.xlu0 %672
    %v676 = vadd.f32 %v656, %v671
    %v677 = vadd.f32 %v657, %v673
    %v678 = vtanh.pop %v676
    %v679 = vtanh.pop %v677
    %682 = vrot.lane.b32.xlu0 %v678, 64
    %v683 = vpop.permute.xlu0 %682
    %684 = vrot.lane.b32.xlu0 %v679, 64
    %v685 = vpop.permute.xlu0 %684
    %v688 = vmul.f32 %v645, %v683
    %v689 = vmul.f32 %v647, %v685
    %v692 = vrot.slane %v688, 4
    %v693 = vrot.slane %v689, 4
    %v696 = vadd.f32 %v572, %v692
    %v697 = vadd.f32 %v573, %v693
    %v698 = vpack.c.bf16 %v688, %v688
    %v699 = vpack.c.bf16 %v689, %v689
    %v702 = vunpack.c.l.b16 %v698
    %v703 = vunpack.c.l.b16 %v699
    %v704 = vrot.slane %v702, 4
    %v705 = vrot.slane %v703, 3
    %v706 = vsel %vm211, %v705, %v704
    %v707 = vpack.c.b16 %v706, %v706
    %708 = vrot.lane.b32.xlu0 %v707, 32
    %v709 = vpop.permute.xlu0 %708
    %v711 = vsel %vm104, %v709, 0
    %713 = vmatprep.subr.bf16.mxu0 0
    %714 = vmatpush1.bf16.msra.mxu0 %v100
    %715 = vmatprep.subr.bf16.mxu0 0
    %716 = vmatpush1.bf16.msra.mxu0 %v101
    %717 = vmatprep.subr.bf16.mxu0 0
    %718 = vmatpush1.bf16.msra.mxu0 0
    %719 = vmatprep.subr.bf16.mxu0 0
    %720 = vmatpush1.bf16.msra.mxu0 0
    %721 = vmatprep.subr.bf16.mxu0 0
    %722 = vmatpush1.bf16.msra.mxu0 0
    %723 = vmatprep.subr.bf16.mxu0 0
    %724 = vmatpush1.bf16.msra.mxu0 0
    %725 = vmatprep.subr.bf16.mxu0 0
    %726 = vmatpush1.bf16.msra.mxu0 0
    %727 = vmatprep.subr.bf16.mxu0 0
    %728 = vmatpush1.bf16.msra.mxu0 0
    %729 = vmatprep.subr.bf16.mxu0 0
    %730 = vmatpush1.bf16.msra.mxu0 0
    %731 = vmatprep.subr.bf16.mxu0 0
    %732 = vmatpush1.bf16.msra.mxu0 0
    %733 = vmatprep.subr.bf16.mxu0 0
    %734 = vmatpush1.bf16.msra.mxu0 0
    %735 = vmatprep.subr.bf16.mxu0 0
    %736 = vmatpush1.bf16.msra.mxu0 0
    %737 = vmatprep.subr.bf16.mxu0 0
    %738 = vmatpush1.bf16.msra.mxu0 0
    %739 = vmatprep.subr.bf16.mxu0 0
    %740 = vmatpush1.bf16.msra.mxu0 0
    %741 = vmatprep.subr.bf16.mxu0 0
    %742 = vmatpush1.bf16.msra.mxu0 0
    %743 = vmatprep.subr.bf16.mxu0 0
    %744 = vmatpush1.bf16.msra.mxu0 0
    %745 = vmatprep.mubr.bf16.mxu0 0
    %746 = vmatmul.mubr.bf16.gmra.mrb[0].mxu0 %v711
    %v747 = vpop.f32.mrb[0].mxu0
    %v748 = vadd.f32 0.0, %v747
    %v749 = vpop.f32.mrb[0].mxu0
    %v750 = vpop.f32.mrb[0].mxu0
    %v751 = vpop.f32.mrb[0].mxu0
    %752 = vdwg.mxu0
    %v754 = vrot.slane %v748, 3
    %v755 = vrot.slane %v748, 4
    %v758 = vadd.f32 %v82, %v754
    %v759 = vadd.f32 %v85, %v755
    %v760 = vxor.u32 %v758, 2147483648
    %v761 = vxor.u32 %v759, 2147483648
    %v762 = vmul.f32 %v760, 1.442695
    %v763 = vpow.pop %v762
    %v764 = vmul.f32 %v761, 1.442695
    %v765 = vpow.pop %v764
    %v766 = vadd.f32 %v763, 1.0
    %v767 = vadd.f32 %v765, 1.0
    %v768 = vrcp.pop %v766
    %v769 = vmul.f32 1.0, %v768
    %v770 = vrcp.pop %v767
    %v771 = vmul.f32 1.0, %v770
    %v772 = vtanh.pop %v758
    %v773 = vtanh.pop %v759
    %v776 = vrot.slane %v676, 7
    %v777 = vrot.slane %v677, 7
    %v780 = vmul.f32 %v769, %v776
    %v781 = vmul.f32 %v771, %v777
    %784 = vrot.lane.b32.xlu0 %v772, 64
    %v785 = vpop.permute.xlu0 %784
    %786 = vrot.lane.b32.xlu0 %v773, 64
    %v787 = vpop.permute.xlu0 %786
    %v790 = vmul.f32 %v769, %v785
    %v791 = vmul.f32 %v771, %v787
    %794 = vrot.lane.b32.xlu0 %v790, 32
    %v795 = vpop.permute.xlu0 %794
    %796 = vrot.lane.b32.xlu0 %v791, 32
    %v797 = vpop.permute.xlu0 %796
    %v800 = vadd.f32 %v780, %v795
    %v801 = vadd.f32 %v781, %v797
    %v802 = vtanh.pop %v800
    %v803 = vtanh.pop %v801
    %806 = vrot.lane.b32.xlu0 %v802, 64
    %v807 = vpop.permute.xlu0 %806
    %808 = vrot.lane.b32.xlu0 %v803, 64
    %v809 = vpop.permute.xlu0 %808
    %v812 = vmul.f32 %v769, %v807
    %v813 = vmul.f32 %v771, %v809
    %v816 = vrot.slane %v812, 5
    %v817 = vrot.slane %v813, 5
    %v820 = vadd.f32 %v696, %v816
    %v821 = vadd.f32 %v697, %v817
    %v822 = vpack.c.bf16 %v812, %v812
    %v823 = vpack.c.bf16 %v813, %v813
    %v826 = vunpack.c.l.b16 %v822
    %v827 = vunpack.c.l.b16 %v823
    %v828 = vrot.slane %v826, 5
    %v829 = vrot.slane %v827, 4
    %v830 = vsel %vm211, %v829, %v828
    %v831 = vpack.c.b16 %v830, %v830
    %832 = vrot.lane.b32.xlu0 %v831, 32
    %v833 = vpop.permute.xlu0 %832
    %v835 = vsel %vm104, %v833, 0
    %837 = vmatprep.subr.bf16.mxu0 0
    %838 = vmatpush1.bf16.msra.mxu0 %v100
    %839 = vmatprep.subr.bf16.mxu0 0
    %840 = vmatpush1.bf16.msra.mxu0 %v101
    %841 = vmatprep.subr.bf16.mxu0 0
    %842 = vmatpush1.bf16.msra.mxu0 0
    %843 = vmatprep.subr.bf16.mxu0 0
    %844 = vmatpush1.bf16.msra.mxu0 0
    %845 = vmatprep.subr.bf16.mxu0 0
    %846 = vmatpush1.bf16.msra.mxu0 0
    %847 = vmatprep.subr.bf16.mxu0 0
    %848 = vmatpush1.bf16.msra.mxu0 0
    %849 = vmatprep.subr.bf16.mxu0 0
    %850 = vmatpush1.bf16.msra.mxu0 0
    %851 = vmatprep.subr.bf16.mxu0 0
    %852 = vmatpush1.bf16.msra.mxu0 0
    %853 = vmatprep.subr.bf16.mxu0 0
    %854 = vmatpush1.bf16.msra.mxu0 0
    %855 = vmatprep.subr.bf16.mxu0 0
    %856 = vmatpush1.bf16.msra.mxu0 0
    %857 = vmatprep.subr.bf16.mxu0 0
    %858 = vmatpush1.bf16.msra.mxu0 0
    %859 = vmatprep.subr.bf16.mxu0 0
    %860 = vmatpush1.bf16.msra.mxu0 0
    %861 = vmatprep.subr.bf16.mxu0 0
    %862 = vmatpush1.bf16.msra.mxu0 0
    %863 = vmatprep.subr.bf16.mxu0 0
    %864 = vmatpush1.bf16.msra.mxu0 0
    %865 = vmatprep.subr.bf16.mxu0 0
    %866 = vmatpush1.bf16.msra.mxu0 0
    %867 = vmatprep.subr.bf16.mxu0 0
    %868 = vmatpush1.bf16.msra.mxu0 0
    %869 = vmatprep.mubr.bf16.mxu0 0
    %870 = vmatmul.mubr.bf16.gmra.mrb[0].mxu0 %v835
    %v871 = vpop.f32.mrb[0].mxu0
    %v872 = vadd.f32 0.0, %v871
    %v873 = vpop.f32.mrb[0].mxu0
    %v874 = vpop.f32.mrb[0].mxu0
    %v875 = vpop.f32.mrb[0].mxu0
    %876 = vdwg.mxu0
    %v878 = vrot.slane %v872, 2
    %v879 = vrot.slane %v872, 3
    %v882 = vadd.f32 %v82, %v878
    %v883 = vadd.f32 %v85, %v879
    %v884 = vxor.u32 %v882, 2147483648
    %v885 = vxor.u32 %v883, 2147483648
    %v886 = vmul.f32 %v884, 1.442695
    %v887 = vpow.pop %v886
    %v888 = vmul.f32 %v885, 1.442695
    %v889 = vpow.pop %v888
    %v890 = vadd.f32 %v887, 1.0
    %v891 = vadd.f32 %v889, 1.0
    %v892 = vrcp.pop %v890
    %v893 = vmul.f32 1.0, %v892
    %v894 = vrcp.pop %v891
    %v895 = vmul.f32 1.0, %v894
    %v896 = vtanh.pop %v882
    %v897 = vtanh.pop %v883
    %v900 = vrot.slane %v800, 7
    %v901 = vrot.slane %v801, 7
    %v904 = vmul.f32 %v893, %v900
    %v905 = vmul.f32 %v895, %v901
    %908 = vrot.lane.b32.xlu0 %v896, 64
    %v909 = vpop.permute.xlu0 %908
    %910 = vrot.lane.b32.xlu0 %v897, 64
    %v911 = vpop.permute.xlu0 %910
    %v914 = vmul.f32 %v893, %v909
    %v915 = vmul.f32 %v895, %v911
    %918 = vrot.lane.b32.xlu0 %v914, 32
    %v919 = vpop.permute.xlu0 %918
    %920 = vrot.lane.b32.xlu0 %v915, 32
    %v921 = vpop.permute.xlu0 %920
    %v924 = vadd.f32 %v904, %v919
    %v925 = vadd.f32 %v905, %v921
    %v926 = vtanh.pop %v924
    %v927 = vtanh.pop %v925
    %930 = vrot.lane.b32.xlu0 %v926, 64
    %v931 = vpop.permute.xlu0 %930
    %932 = vrot.lane.b32.xlu0 %v927, 64
    %v933 = vpop.permute.xlu0 %932
    %v936 = vmul.f32 %v893, %v931
    %v937 = vmul.f32 %v895, %v933
    %v940 = vrot.slane %v936, 6
    %v941 = vrot.slane %v937, 6
    %v944 = vadd.f32 %v820, %v940
    %v945 = vadd.f32 %v821, %v941
    %v946 = vpack.c.bf16 %v936, %v936
    %v947 = vpack.c.bf16 %v937, %v937
    %v950 = vunpack.c.l.b16 %v946
    %v951 = vunpack.c.l.b16 %v947
    %v952 = vrot.slane %v950, 6
    %v953 = vrot.slane %v951, 5
    %v954 = vsel %vm211, %v953, %v952
    %v955 = vpack.c.b16 %v954, %v954
    %956 = vrot.lane.b32.xlu0 %v955, 32
    %v957 = vpop.permute.xlu0 %956
    %v959 = vsel %vm104, %v957, 0
    %961 = vmatprep.subr.bf16.mxu0 0
    %962 = vmatpush1.bf16.msra.mxu0 %v100
    %963 = vmatprep.subr.bf16.mxu0 0
    %964 = vmatpush1.bf16.msra.mxu0 %v101
    %965 = vmatprep.subr.bf16.mxu0 0
    %966 = vmatpush1.bf16.msra.mxu0 0
    %967 = vmatprep.subr.bf16.mxu0 0
    %968 = vmatpush1.bf16.msra.mxu0 0
    %969 = vmatprep.subr.bf16.mxu0 0
    %970 = vmatpush1.bf16.msra.mxu0 0
    %971 = vmatprep.subr.bf16.mxu0 0
    %972 = vmatpush1.bf16.msra.mxu0 0
    %973 = vmatprep.subr.bf16.mxu0 0
    %974 = vmatpush1.bf16.msra.mxu0 0
    %975 = vmatprep.subr.bf16.mxu0 0
    %976 = vmatpush1.bf16.msra.mxu0 0
    %977 = vmatprep.subr.bf16.mxu0 0
    %978 = vmatpush1.bf16.msra.mxu0 0
    %979 = vmatprep.subr.bf16.mxu0 0
    %980 = vmatpush1.bf16.msra.mxu0 0
    %981 = vmatprep.subr.bf16.mxu0 0
    %982 = vmatpush1.bf16.msra.mxu0 0
    %983 = vmatprep.subr.bf16.mxu0 0
    %984 = vmatpush1.bf16.msra.mxu0 0
    %985 = vmatprep.subr.bf16.mxu0 0
    %986 = vmatpush1.bf16.msra.mxu0 0
    %987 = vmatprep.subr.bf16.mxu0 0
    %988 = vmatpush1.bf16.msra.mxu0 0
    %989 = vmatprep.subr.bf16.mxu0 0
    %990 = vmatpush1.bf16.msra.mxu0 0
    %991 = vmatprep.subr.bf16.mxu0 0
    %992 = vmatpush1.bf16.msra.mxu0 0
    %993 = vmatprep.mubr.bf16.mxu0 0
    %994 = vmatmul.mubr.bf16.gmra.mrb[0].mxu0 %v959
    %v995 = vpop.f32.mrb[0].mxu0
    %v996 = vadd.f32 0.0, %v995
    %v997 = vpop.f32.mrb[0].mxu0
    %v998 = vpop.f32.mrb[0].mxu0
    %v999 = vpop.f32.mrb[0].mxu0
    %1000 = vdwg.mxu0
    %v1002 = vrot.slane %v996, 1
    %v1003 = vrot.slane %v996, 2
    %v1006 = vadd.f32 %v82, %v1002
    %v1007 = vadd.f32 %v85, %v1003
    %v1008 = vxor.u32 %v1006, 2147483648
    %v1009 = vxor.u32 %v1007, 2147483648
    %v1010 = vmul.f32 %v1008, 1.442695
    %v1011 = vpow.pop %v1010
    %v1012 = vmul.f32 %v1009, 1.442695
    %v1013 = vpow.pop %v1012
    %v1014 = vadd.f32 %v1011, 1.0
    %v1015 = vadd.f32 %v1013, 1.0
    %v1016 = vrcp.pop %v1014
    %v1017 = vmul.f32 1.0, %v1016
    %v1018 = vrcp.pop %v1015
    %v1019 = vmul.f32 1.0, %v1018
    %v1020 = vtanh.pop %v1006
    %v1021 = vtanh.pop %v1007
    %v1024 = vrot.slane %v924, 7
    %v1025 = vrot.slane %v925, 7
    %v1028 = vmul.f32 %v1017, %v1024
    %v1029 = vmul.f32 %v1019, %v1025
    %1032 = vrot.lane.b32.xlu0 %v1020, 64
    %v1033 = vpop.permute.xlu0 %1032
    %1034 = vrot.lane.b32.xlu0 %v1021, 64
    %v1035 = vpop.permute.xlu0 %1034
    %v1038 = vmul.f32 %v1017, %v1033
    %v1039 = vmul.f32 %v1019, %v1035
    %1042 = vrot.lane.b32.xlu0 %v1038, 32
    %v1043 = vpop.permute.xlu0 %1042
    %1044 = vrot.lane.b32.xlu0 %v1039, 32
    %v1045 = vpop.permute.xlu0 %1044
    %v1048 = vadd.f32 %v1028, %v1043
    %v1049 = vadd.f32 %v1029, %v1045
    %v1050 = vtanh.pop %v1048
    %v1051 = vtanh.pop %v1049
    %1054 = vrot.lane.b32.xlu0 %v1050, 64
    %v1055 = vpop.permute.xlu0 %1054
    %1056 = vrot.lane.b32.xlu0 %v1051, 64
    %v1057 = vpop.permute.xlu0 %1056
    %v1060 = vmul.f32 %v1017, %v1055
    %v1061 = vmul.f32 %v1019, %v1057
    %v1064 = vrot.slane %v1060, 7
    %v1065 = vrot.slane %v1061, 7
    %v1068 = vadd.f32 %v944, %v1064
    %v1069 = vadd.f32 %v945, %v1065
    %v1070 = vmul.f32 %v1068, 0.125
    %v1071 = vmul.f32 %v1069, 0.125
    %v1072 = vpack.c.bf16 %v1070, %v1070
    %v1073 = vpack.c.bf16 %v1071, %v1071
    %v1074 = vld [vmem:[%s4] sm:$0xf]
    %v1075 = vld [vmem:[%s4 + $0x4] sm:$0xf]
    %v1076 = vld [vmem:[%s4 + $0x8] sm:$0xf]
    %v1077 = vld [vmem:[%s4 + $0xc] sm:$0xf]
    %v1078 = vld [vmem:[%s5] sm:$0x1]
    %v1080 = vlaneseq
    %v1081 = vshrl.u32 %v1080, 7
    %v1082 = vsub.s32 0, %v1081
    %v1083 = vrot.slane %v1078, %v1082
    %v1087 = vunpack.c.l.b16 %v1072
    %v1088 = vunpack.c.l.b16 %v1073
    %v1089 = vrot.slane %v1088, 7
    %v1090 = vsel %vm211, %v1089, %v1087
    %v1091 = vpack.c.b16 %v1090, %v1090
    %1092 = vrot.lane.b32.xlu0 %v1091, 32
    %v1093 = vpop.permute.xlu0 %1092
    %v1098 = vunpack.c.l.b16 %v1074
    %v1099 = vunpack.c.l.b16 %v1075
    %v1100 = vunpack.c.l.b16 %v1076
    %v1101 = vunpack.c.l.b16 %v1077
    %v1102 = vpack.c.b16 %v1099, %v1098
    %v1103 = vpack.c.b16 %v1101, %v1100
    %v1107 = vsel %vm104, %v1093, 0
    %1109 = vmatprep.subr.bf16.mxu0 0
    %1110 = vmatpush1.bf16.msra.mxu0 %v1102
    %1111 = vmatprep.subr.bf16.mxu0 0
    %1112 = vmatpush1.bf16.msra.mxu0 %v1103
    %1113 = vmatprep.subr.bf16.mxu0 0
    %1114 = vmatpush1.bf16.msra.mxu0 0
    %1115 = vmatprep.subr.bf16.mxu0 0
    %1116 = vmatpush1.bf16.msra.mxu0 0
    %1117 = vmatprep.subr.bf16.mxu0 0
    %1118 = vmatpush1.bf16.msra.mxu0 0
    %1119 = vmatprep.subr.bf16.mxu0 0
    %1120 = vmatpush1.bf16.msra.mxu0 0
    %1121 = vmatprep.subr.bf16.mxu0 0
    %1122 = vmatpush1.bf16.msra.mxu0 0
    %1123 = vmatprep.subr.bf16.mxu0 0
    %1124 = vmatpush1.bf16.msra.mxu0 0
    %1125 = vmatprep.subr.bf16.mxu0 0
    %1126 = vmatpush1.bf16.msra.mxu0 0
    %1127 = vmatprep.subr.bf16.mxu0 0
    %1128 = vmatpush1.bf16.msra.mxu0 0
    %1129 = vmatprep.subr.bf16.mxu0 0
    %1130 = vmatpush1.bf16.msra.mxu0 0
    %1131 = vmatprep.subr.bf16.mxu0 0
    %1132 = vmatpush1.bf16.msra.mxu0 0
    %1133 = vmatprep.subr.bf16.mxu0 0
    %1134 = vmatpush1.bf16.msra.mxu0 0
    %1135 = vmatprep.subr.bf16.mxu0 0
    %1136 = vmatpush1.bf16.msra.mxu0 0
    %1137 = vmatprep.subr.bf16.mxu0 0
    %1138 = vmatpush1.bf16.msra.mxu0 0
    %1139 = vmatprep.subr.bf16.mxu0 0
    %1140 = vmatpush1.bf16.msra.mxu0 0
    %1141 = vmatprep.mubr.bf16.mxu0 0
    %1142 = vmatmul.mubr.bf16.gmra.mrb[0].mxu0 %v1107
    %v1143 = vpop.f32.mrb[0].mxu0
    %v1144 = vadd.f32 %v1083, %v1143
    %v1145 = vpop.f32.mrb[0].mxu0
    %v1146 = vpop.f32.mrb[0].mxu0
    %v1147 = vpop.f32.mrb[0].mxu0
    %1148 = vdwg.mxu0
    %vm1149 = vcmask 123904
    %1150 = vst.msk [vmem:[#allocation2] sm:$0x3] %vm1149, %v1144
    // Predicated region
    $region26: #{lstm_net_forward.1} parent=1 // pred_check
      _
    $region27: #{lstm_net_forward.1} parent=1 // pred_check_branch
      %1152 = sbr.rel (0) target = $region29
    $region28: #{lstm_net_forward.1} parent=1 // pred_region
      %s1154 = ssub.s32 32, 32
      %1155 = vsyncadd [#allocation3], %s1154
      %s1157 = sshll.u32 [#allocation2], 4
      %s1158 = int_to_ptr.vmem [resolvable:$true] %s1157
      %1160 = dma.vmem_to_hbm [thread:$0]  %s1158, 32, %s6, [#allocation3]
    $region29: #{lstm_net_forward.1} parent=1 // pred_fallthru
      _
    // Predicated region
    $region30: #{lstm_net_forward.1} parent=1 // pred_check
      _
    $region31: #{lstm_net_forward.1} parent=1 // pred_check_branch
      %1162 = sbr.rel (0) target = $region33
    $region32: #{lstm_net_forward.1} parent=1 // pred_region
      %1163 = dma.done [#allocation3], 32
    $region33: #{lstm_net_forward.1} parent=1 // pred_fallthru
      _
    %1164 = vsyncpa [#allocation3], 1

</llo_original>
